<compile_context>
chip_gen: v7x
topology: tpu7x:2x2x1
jax: 0.10.0
libtpu: 0.0.40
codegen_flags: <defaults>
</compile_context>

<pallas_src>
import jax
import jax.numpy as jnp
from jax import lax
from jax.experimental import pallas as pl
from jax.experimental.pallas import tpu as pltpu

# ---- problem sizes (consistent with the module's forward) ------------------
N, C_IN, H, W = 2, 4, 16, 16
C_OUT = 8
KH, KW = 3, 3
PAD = 1                        # "same" padding for stride-1 3x3
LANES = 128                    # lane-pad W*C_IN = 64 up to a full 128-lane tile
DATA_LANES = W * C_IN          # 64 active input lanes, lane = w*C_IN + ci
BIAS_LANE = DATA_LANES         # dead lane 64 carries constant 1.0 (bias fold)
OUT_LANES = W * C_OUT          # 128: lane-dense output, lane = w*C_OUT + co


def conv_relu_kernel(x_ref, t_ref, o_ref):
    """Fused 3x3 conv + bias + ReLU, fully lane-dense, batch folded into M.

    x_ref: (N, H, 128) bf16   lane-packed activations; lane 64 == 1.0, 65..127 == 0
    t_ref: (KH, 128, 128) bf16 block-Toeplitz taps; horizontal padding folded in
                               as zero columns, bias in T[1][BIAS_LANE, :]
    o_ref: (N, H, 128) f32    lane-dense output
    """
    xd = x_ref[...].reshape(N * H, LANES)                 # free reshape (leading dims)

    # One MXU push per vertical tap, M = N*H = 32, K = N_lanes = 128, f32 accum.
    y0 = jnp.dot(xd, t_ref[0], preferred_element_type=jnp.float32)
    y1 = jnp.dot(xd, t_ref[1], preferred_element_type=jnp.float32)
    y2 = jnp.dot(xd, t_ref[2], preferred_element_type=jnp.float32)

    # Vertical "same" padding: out[r] = y0[r-1] + y1[r] + y2[r+1], with the
    # r-1 / r+1 terms zeroed at the top / bottom row of each image.  Sublane
    # rolls go to the XLU; masks are cheap VPU selects.
    h_idx = lax.broadcasted_iota(jnp.int32, (N, H, OUT_LANES), 1).reshape(
        N * H, OUT_LANES)
    down = jnp.where(h_idx == 0, 0.0, pltpu.roll(y0, shift=1, axis=0))
    up = jnp.where(h_idx == H - 1, 0.0,
                   pltpu.roll(y2, shift=N * H - 1, axis=0))   # == shift -1
    acc = y1 + down + up

    o_ref[...] = jnp.maximum(acc, 0.0).reshape(N, H, OUT_LANES)


def prepare_conv_params(weight_oihw, bias):
    """One-time parameter packing (hoisted out of the forward pass).

    Builds bf16 block-Toeplitz taps T[kh, wi*C_IN+ci, w*C_OUT+co] =
    W[co, ci, kh, kw] for wi = w + kw - PAD, 0 <= wi < W (zero elsewhere, which
    implements the horizontal zero padding), with the bias tiled into row
    BIAS_LANE of the centre tap T[1].
    """
    w_hwio = jnp.transpose(weight_oihw, (2, 3, 1, 0)).astype(jnp.float32)  # (KH,KW,CI,CO)
    t = jnp.zeros((KH, LANES, OUT_LANES), dtype=jnp.float32)
    for kw in range(KW):
        for w in range(W):
            wi = w + kw - PAD
            if 0 <= wi < W:
                t = t.at[:, wi * C_IN:(wi + 1) * C_IN,
                         w * C_OUT:(w + 1) * C_OUT].set(w_hwio[:, kw])
    t = t.at[1, BIAS_LANE, :].set(jnp.tile(bias.astype(jnp.float32), W))
    return t.astype(jnp.bfloat16)


def conv_block_forward(x_nchw, t_packed):
    """ConvBlock.forward: relu(conv2d(x)).  x is NCHW like PyTorch."""
    # NCHW -> lane-packed (N, H, 128) bf16: data in lanes 0..63 (channels
    # fastest), constant 1.0 in the bias lane, zeros elsewhere.  All of this
    # fuses into the one unavoidable transpose on the XLA side.
    x_flat = jnp.transpose(x_nchw, (0, 2, 3, 1)).reshape(N, H, DATA_LANES)
    xd = jnp.concatenate(
        [x_flat,
         jnp.ones((N, H, 1), x_flat.dtype),
         jnp.zeros((N, H, LANES - DATA_LANES - 1), x_flat.dtype)],
        axis=-1).astype(jnp.bfloat16)

    vmem = pl.BlockSpec(memory_space=pltpu.MemorySpace.VMEM)
    # Gridless: whole problem (~120 KiB of VMEM) in one invocation.  If this op
    # is ever scaled up, add a grid over N / H-row blocks with
    # dimension_semantics=("parallel",) so v7x's two TensorCores share work.
    out_packed = pl.pallas_call(
        conv_relu_kernel,
        out_shape=jax.ShapeDtypeStruct((N, H, OUT_LANES), jnp.float32),
        in_specs=[vmem, vmem],
        out_specs=vmem,
    )(xd, t_packed)

    # lane-packed (N, H, W*C_OUT) -> NCHW to match the PyTorch output convention.
    # TODO(synk): if stacking ConvBlocks, keep activations lane-packed between
    # layers and drop this transpose (and the one above).
    return jnp.transpose(out_packed.reshape(N, H, W, C_OUT), (0, 3, 1, 2))


if __name__ == "__main__":
    key = jax.random.PRNGKey(0)
    kx, kw_key, kb = jax.random.split(key, 3)

    # Deterministic init, shapes match nn.Conv2d(C_IN, C_OUT, 3, padding=1).
    fan_in = C_IN * KH * KW
    bound = 1.0 / (fan_in ** 0.5)
    weight = jax.random.uniform(kw_key, (C_OUT, C_IN, KH, KW),
                                minval=-bound, maxval=bound, dtype=jnp.float32)
    bias = jax.random.uniform(kb, (C_OUT,),
                              minval=-bound, maxval=bound, dtype=jnp.float32)
    x = jax.random.normal(kx, (N, C_IN, H, W), dtype=jnp.float32)

    # Parameter packing done once, outside the hot forward path.
    t_packed = prepare_conv_params(weight, bias)

    out = jax.block_until_ready(conv_block_forward(x, t_packed))

    # Reference at matching precision (bf16 operands, f32 accumulation), same
    # semantics as F.relu(self.conv(x)).
    xq = x.astype(jnp.bfloat16).astype(jnp.float32)
    wq = weight.astype(jnp.bfloat16).astype(jnp.float32)
    bq = bias.astype(jnp.bfloat16).astype(jnp.float32)
    ref = lax.conv_general_dilated(
        xq, wq, window_strides=(1, 1), padding=((PAD, PAD), (PAD, PAD)),
        dimension_numbers=("NCHW", "OIHW", "NCHW"))
    ref = jnp.maximum(ref + bq[None, :, None, None], 0.0)

    assert out.shape == (N, C_OUT, H, W)
    assert jnp.allclose(out, ref, atol=2e-2, rtol=2e-2)

    print("KERNEL_OK")
</pallas_src>

<mosaic_0001>
module attributes {stable_mosaic.version = 11 : i64} {
  func.func @conv_relu_kernel(%arg0: memref<2x16x128xbf16, #tpu.memory_space<vmem>>, %arg1: memref<3x128x128xbf16, #tpu.memory_space<vmem>>, %arg2: memref<2x16x128xf32, #tpu.memory_space<vmem>>) attributes {dimension_semantics = [], scalar_prefetch = 0 : i64, scratch_operands = 0 : i64, tpu.core_type = #tpu.core_type<tc>} {
    %c0 = arith.constant 0 : index
    %c0_0 = arith.constant 0 : index
    %c0_1 = arith.constant 0 : index
    %0 = vector.load %arg0[%c0, %c0_0, %c0_1] : memref<2x16x128xbf16, #tpu.memory_space<vmem>>, vector<2x16x128xbf16>
    %1 = vector.shape_cast %0 : vector<2x16x128xbf16> to vector<32x128xbf16>
    %c0_2 = arith.constant 0 : index
    %c0_3 = arith.constant 0 : index
    %c0_4 = arith.constant 0 : index
    %2 = vector.load %arg1[%c0_2, %c0_3, %c0_4] : memref<3x128x128xbf16, #tpu.memory_space<vmem>>, vector<1x128x128xbf16>
    %3 = vector.shape_cast %2 : vector<1x128x128xbf16> to vector<128x128xbf16>
    %cst = arith.constant dense<0.000000e+00> : vector<32x128xf32>
    %4 = tpu.matmul %1, %3, %cst {dimension_numbers = #tpu.dot_dimension_numbers<[1], [0], [0], [1], [0, 0, 1, 1], [], []>} : vector<32x128xbf16>, vector<128x128xbf16>, vector<32x128xf32> -> vector<32x128xf32>
    %c1 = arith.constant 1 : index
    %c0_5 = arith.constant 0 : index
    %c0_6 = arith.constant 0 : index
    %5 = vector.load %arg1[%c1, %c0_5, %c0_6] : memref<3x128x128xbf16, #tpu.memory_space<vmem>>, vector<1x128x128xbf16>
    %6 = vector.shape_cast %5 : vector<1x128x128xbf16> to vector<128x128xbf16>
    %cst_7 = arith.constant dense<0.000000e+00> : vector<32x128xf32>
    %7 = tpu.matmul %1, %6, %cst_7 {dimension_numbers = #tpu.dot_dimension_numbers<[1], [0], [0], [1], [0, 0, 1, 1], [], []>} : vector<32x128xbf16>, vector<128x128xbf16>, vector<32x128xf32> -> vector<32x128xf32>
    %c2 = arith.constant 2 : index
    %c0_8 = arith.constant 0 : index
    %c0_9 = arith.constant 0 : index
    %8 = vector.load %arg1[%c2, %c0_8, %c0_9] : memref<3x128x128xbf16, #tpu.memory_space<vmem>>, vector<1x128x128xbf16>
    %9 = vector.shape_cast %8 : vector<1x128x128xbf16> to vector<128x128xbf16>
    %cst_10 = arith.constant dense<0.000000e+00> : vector<32x128xf32>
    %10 = tpu.matmul %1, %9, %cst_10 {dimension_numbers = #tpu.dot_dimension_numbers<[1], [0], [0], [1], [0, 0, 1, 1], [], []>} : vector<32x128xbf16>, vector<128x128xbf16>, vector<32x128xf32> -> vector<32x128xf32>
    %11 = tpu.iota {dimensions = array<i32: 1>} : vector<2x16x128xi32>
    %12 = vector.shape_cast %11 : vector<2x16x128xi32> to vector<32x128xi32>
    %c0_i32 = arith.constant 0 : i32
    %13 = vector.broadcast %c0_i32 : i32 to vector<32x128xi32>
    %14 = arith.cmpi eq, %12, %13 : vector<32x128xi32>
    %c1_i32 = arith.constant 1 : i32
    %15 = tpu.dynamic_rotate %4 by %c1_i32 dim 0 : vector<32x128xf32>, i32 -> vector<32x128xf32>
    %cst_11 = arith.constant 0.000000e+00 : f32
    %16 = vector.broadcast %cst_11 : f32 to vector<32x128xf32>
    %17 = arith.select %14, %16, %15 : vector<32x128xi1>, vector<32x128xf32>
    %c15_i32 = arith.constant 15 : i32
    %18 = vector.broadcast %c15_i32 : i32 to vector<32x128xi32>
    %19 = arith.cmpi eq, %12, %18 : vector<32x128xi32>
    %c31_i32 = arith.constant 31 : i32
    %20 = tpu.dynamic_rotate %10 by %c31_i32 dim 0 : vector<32x128xf32>, i32 -> vector<32x128xf32>
    %cst_12 = arith.constant 0.000000e+00 : f32
    %21 = vector.broadcast %cst_12 : f32 to vector<32x128xf32>
    %22 = arith.select %19, %21, %20 : vector<32x128xi1>, vector<32x128xf32>
    %23 = arith.addf %7, %17 : vector<32x128xf32>
    %24 = arith.addf %23, %22 : vector<32x128xf32>
    %cst_13 = arith.constant 0.000000e+00 : f32
    %25 = vector.broadcast %cst_13 : f32 to vector<32x128xf32>
    %26 = arith.maximumf %24, %25 : vector<32x128xf32>
    %27 = vector.shape_cast %26 : vector<32x128xf32> to vector<2x16x128xf32>
    %c0_14 = arith.constant 0 : index
    %c0_15 = arith.constant 0 : index
    %c0_16 = arith.constant 0 : index
    %28 = vector.load %arg2[%c0_14, %c0_15, %c0_16] : memref<2x16x128xf32, #tpu.memory_space<vmem>>, vector<2x16x128xf32>
    tpu.vector_store %arg2[%c0_14, %c0_15, %c0_16], %27 {strides = array<i32>} : memref<2x16x128xf32, #tpu.memory_space<vmem>>, vector<2x16x128xf32>,
    return
  }
}

</mosaic_0001>

<llo_original>
// kernel: tpu_custom_call.1
$region0: #{tpu_custom_call.1}
  #allocation0 [shape = 'u32[]', space=smem, size = 0x4, offset = 0x4, fixed_abs, tag = 'smem constant byte address 0x4 - core index']
  #allocation1 [shape = 'u32[144,128]{1,0:T(1,128)}', space=vmem, size = 0x12000, scoped, tag = 'internal scratch']
  %s0 = inlined_call_operand.hbm [shape: bf16[2,16,128], index: 0, kind: input, shape index: {}]
  %s1 = inlined_call_operand.hbm [shape: bf16[3,128,128], index: 1, kind: input, shape index: {}]
  %s2 = inlined_call_operand.hbm [shape: f32[2,16,128], index: 2, kind: output, shape index: {}]
  %s3 = sld [smem:[#allocation0]]
  $region26: #{tpu_custom_call.1} parent=0
    _
  %s5 = ssub.s32 1, %s3
  %s6 = scalar_select 0, %s5, %s3
  $region1: #{tpu_custom_call.1} parent=0
    #allocation2 [shape = 'u8[8192]{0}', space=vmem, size = 0x2000, scoped, tag = 'input window, operand 0, single buffered']
    #allocation3 [shape = 's32[1]{0}', space=sflag, size = 0x4, scoped, tag = 'scoped memory for tpu_custom_call.1']
    #allocation4 [shape = 's32[1]{0}', space=sflag, size = 0x4, scoped, tag = 'scoped memory for tpu_custom_call.1']
    #allocation5 [shape = 'u8[98304]{0}', space=vmem, size = 0x18000, scoped, tag = 'input window, operand 1, single buffered']
    #allocation6 [shape = 's32[1]{0}', space=sflag, size = 0x4, scoped, tag = 'scoped memory for tpu_custom_call.1']
    #allocation7 [shape = 'u8[16384]{0}', space=vmem, size = 0x4000, scoped, tag = 'output window, operand 0, single buffered']
    %7 = vsyncpa [#allocation3], 0
    %8 = vsyncpa [#allocation6], 0
    %9 = vsyncpa [#allocation4], 0
    // Predicated region
    $region2: #{tpu_custom_call.1} parent=1 // pred_check
      _
    $region3: #{tpu_custom_call.1} parent=1 // pred_check_branch
      %11 = sbr.rel (0) target = $region5
    $region4: #{tpu_custom_call.1} parent=1 // pred_region
      %s13 = ssub.s32 256, 256
      %14 = vsyncadd [#allocation3], %s13
      %s15 = sshll.u32 [#allocation2], 4
      %s16 = int_to_ptr.vmem [resolvable:$true] %s15
      %21 = dma.hbm_to_vmem [thread:$0]  %s0, 256, %s16, [#allocation3], 64, 64, 4
    $region5: #{tpu_custom_call.1} parent=1 // pred_fallthru
      _
    // Predicated region
    $region6: #{tpu_custom_call.1} parent=1 // pred_check
      _
    $region7: #{tpu_custom_call.1} parent=1 // pred_check_branch
      %23 = sbr.rel (0) target = $region9
    $region8: #{tpu_custom_call.1} parent=1 // pred_region
      %s25 = ssub.s32 3072, 3072
      %26 = vsyncadd [#allocation6], %s25
      %s27 = sshll.u32 [#allocation5], 4
      %s28 = int_to_ptr.vmem [resolvable:$true] %s27
      %33 = dma.hbm_to_vmem [thread:$0]  %s1, 3072, %s28, [#allocation6], 64, 64, 4
    $region9: #{tpu_custom_call.1} parent=1 // pred_fallthru
      _
    // Predicated region
    $region10: #{tpu_custom_call.1} parent=1 // pred_check
      _
    $region11: #{tpu_custom_call.1} parent=1 // pred_check_branch
      %35 = sbr.rel (0) target = $region13
    $region12: #{tpu_custom_call.1} parent=1 // pred_region
      %36 = dma.done [#allocation3], 256
    $region13: #{tpu_custom_call.1} parent=1 // pred_fallthru
      _
    // Predicated region
    $region14: #{tpu_custom_call.1} parent=1 // pred_check
      _
    $region15: #{tpu_custom_call.1} parent=1 // pred_check_branch
      %38 = sbr.rel (0) target = $region17
    $region16: #{tpu_custom_call.1} parent=1 // pred_region
      %39 = dma.done [#allocation6], 3072
    $region17: #{tpu_custom_call.1} parent=1 // pred_fallthru
      _
    %v41 = vld [vmem:[#allocation2] sm:$0xf]
    %v42 = vld [vmem:[#allocation2 + $0x4] sm:$0xf]
    %v43 = vld [vmem:[#allocation2 + $0x8] sm:$0xf]
    %v44 = vld [vmem:[#allocation2 + $0xc] sm:$0xf]
    %v45 = vld [vmem:[#allocation5] sm:$0xf]
    %v46 = vld [vmem:[#allocation5 + $0x4] sm:$0xf]
    %v47 = vld [vmem:[#allocation5 + $0x8] sm:$0xf]
    %v48 = vld [vmem:[#allocation5 + $0xc] sm:$0xf]
    %v49 = vld [vmem:[#allocation5 + $0x10] sm:$0xf]
    %v50 = vld [vmem:[#allocation5 + $0x14] sm:$0xf]
    %v51 = vld [vmem:[#allocation5 + $0x18] sm:$0xf]
    %v52 = vld [vmem:[#allocation5 + $0x1c] sm:$0xf]
    %v53 = vld [vmem:[#allocation5 + $0x20] sm:$0xf]
    %v54 = vld [vmem:[#allocation5 + $0x24] sm:$0xf]
    %v55 = vld [vmem:[#allocation5 + $0x28] sm:$0xf]
    %v56 = vld [vmem:[#allocation5 + $0x2c] sm:$0xf]
    %v57 = vld [vmem:[#allocation5 + $0x30] sm:$0xf]
    %v58 = vld [vmem:[#allocation5 + $0x34] sm:$0xf]
    %v59 = vld [vmem:[#allocation5 + $0x38] sm:$0xf]
    %v60 = vld [vmem:[#allocation5 + $0x3c] sm:$0xf]
    %v65 = vunpack.c.l.b16 %v41
    %v66 = vunpack.c.l.b16 %v42
    %v67 = vunpack.c.l.b16 %v43
    %v68 = vunpack.c.l.b16 %v44
    %v69 = vpack.c.b16 %v66, %v65
    %v70 = vpack.c.b16 %v68, %v67
    %v89 = vunpack.c.l.b16 %v45
    %v90 = vunpack.c.l.b16 %v46
    %v91 = vunpack.c.l.b16 %v47
    %v92 = vunpack.c.l.b16 %v48
    %v93 = vunpack.c.l.b16 %v49
    %v94 = vunpack.c.l.b16 %v50
    %v95 = vunpack.c.l.b16 %v51
    %v96 = vunpack.c.l.b16 %v52
    %v97 = vunpack.c.l.b16 %v53
    %v98 = vunpack.c.l.b16 %v54
    %v99 = vunpack.c.l.b16 %v55
    %v100 = vunpack.c.l.b16 %v56
    %v101 = vunpack.c.l.b16 %v57
    %v102 = vunpack.c.l.b16 %v58
    %v103 = vunpack.c.l.b16 %v59
    %v104 = vunpack.c.l.b16 %v60
    %v105 = vpack.c.b16 %v90, %v89
    %v106 = vpack.c.b16 %v92, %v91
    %v107 = vpack.c.b16 %v94, %v93
    %v108 = vpack.c.b16 %v96, %v95
    %v109 = vpack.c.b16 %v98, %v97
    %v110 = vpack.c.b16 %v100, %v99
    %v111 = vpack.c.b16 %v102, %v101
    %v112 = vpack.c.b16 %v104, %v103
    %121 = vmatprep.subr.bf16.mxu0 0
    %122 = vmatpush1.bf16.msra.mxu0 %v105
    %123 = vmatprep.subr.bf16.mxu0 0
    %124 = vmatpush1.bf16.msra.mxu0 %v106
    %125 = vmatprep.subr.bf16.mxu0 0
    %126 = vmatpush1.bf16.msra.mxu0 %v107
    %127 = vmatprep.subr.bf16.mxu0 0
    %128 = vmatpush1.bf16.msra.mxu0 %v108
    %129 = vmatprep.subr.bf16.mxu0 0
    %130 = vmatpush1.bf16.msra.mxu0 %v109
    %131 = vmatprep.subr.bf16.mxu0 0
    %132 = vmatpush1.bf16.msra.mxu0 %v110
    %133 = vmatprep.subr.bf16.mxu0 0
    %134 = vmatpush1.bf16.msra.mxu0 %v111
    %135 = vmatprep.subr.bf16.mxu0 0
    %136 = vmatpush1.bf16.msra.mxu0 %v112
    %137 = vmatprep.subr.bf16.mxu0 0
    %138 = vmatpush1.bf16.msra.mxu0 0
    %139 = vmatprep.subr.bf16.mxu0 0
    %140 = vmatpush1.bf16.msra.mxu0 0
    %141 = vmatprep.subr.bf16.mxu0 0
    %142 = vmatpush1.bf16.msra.mxu0 0
    %143 = vmatprep.subr.bf16.mxu0 0
    %144 = vmatpush1.bf16.msra.mxu0 0
    %145 = vmatprep.subr.bf16.mxu0 0
    %146 = vmatpush1.bf16.msra.mxu0 0
    %147 = vmatprep.subr.bf16.mxu0 0
    %148 = vmatpush1.bf16.msra.mxu0 0
    %149 = vmatprep.subr.bf16.mxu0 0
    %150 = vmatpush1.bf16.msra.mxu0 0
    %151 = vmatprep.subr.bf16.mxu0 0
    %152 = vmatpush1.bf16.msra.mxu0 0
    %153 = vmatprep.mubr.bf16.mxu0 0
    %154 = vmatmul.mubr.bf16.gmra.mrb[0].mxu0 %v69
    %v155 = vpop.f32.mrb[0].mxu0
    %v156 = vadd.f32 0.0, %v155
    %v157 = vpop.f32.mrb[0].mxu0
    %v158 = vpop.f32.mrb[0].mxu0
    %v159 = vadd.f32 0.0, %v158
    %v160 = vpop.f32.mrb[0].mxu0
    %161 = vmatprep.mubr.bf16.mxu0 0
    %162 = vmatmul.mubr.bf16.gmra.mrb[0].mxu0 %v70
    %v163 = vpop.f32.mrb[0].mxu0
    %v164 = vadd.f32 0.0, %v163
    %v165 = vpop.f32.mrb[0].mxu0
    %v166 = vpop.f32.mrb[0].mxu0
    %v167 = vadd.f32 0.0, %v166
    %v168 = vpop.f32.mrb[0].mxu0
    %169 = vdwg.mxu0
    %s170 = scalar_lea.vmem [#allocation5], 64
    %v171 = vld [vmem:[%s170] sm:$0xf]
    %v172 = vld [vmem:[%s170 + $0x4] sm:$0xf]
    %v173 = vld [vmem:[%s170 + $0x8] sm:$0xf]
    %v174 = vld [vmem:[%s170 + $0xc] sm:$0xf]
    %v175 = vld [vmem:[%s170 + $0x10] sm:$0xf]
    %v176 = vld [vmem:[%s170 + $0x14] sm:$0xf]
    %v177 = vld [vmem:[%s170 + $0x18] sm:$0xf]
    %v178 = vld [vmem:[%s170 + $0x1c] sm:$0xf]
    %v179 = vld [vmem:[%s170 + $0x20] sm:$0xf]
    %v180 = vld [vmem:[%s170 + $0x24] sm:$0xf]
    %v181 = vld [vmem:[%s170 + $0x28] sm:$0xf]
    %v182 = vld [vmem:[%s170 + $0x2c] sm:$0xf]
    %v183 = vld [vmem:[%s170 + $0x30] sm:$0xf]
    %v184 = vld [vmem:[%s170 + $0x34] sm:$0xf]
    %v185 = vld [vmem:[%s170 + $0x38] sm:$0xf]
    %v186 = vld [vmem:[%s170 + $0x3c] sm:$0xf]
    %s187 = scalar_lea.vmem [#allocation5], 128
    %v188 = vld [vmem:[%s187] sm:$0xf]
    %v189 = vld [vmem:[%s187 + $0x4] sm:$0xf]
    %v190 = vld [vmem:[%s187 + $0x8] sm:$0xf]
    %v191 = vld [vmem:[%s187 + $0xc] sm:$0xf]
    %v192 = vld [vmem:[%s187 + $0x10] sm:$0xf]
    %v193 = vld [vmem:[%s187 + $0x14] sm:$0xf]
    %v194 = vld [vmem:[%s187 + $0x18] sm:$0xf]
    %v195 = vld [vmem:[%s187 + $0x1c] sm:$0xf]
    %v196 = vld [vmem:[%s187 + $0x20] sm:$0xf]
    %v197 = vld [vmem:[%s187 + $0x24] sm:$0xf]
    %v198 = vld [vmem:[%s187 + $0x28] sm:$0xf]
    %v199 = vld [vmem:[%s187 + $0x2c] sm:$0xf]
    %v200 = vld [vmem:[%s187 + $0x30] sm:$0xf]
    %v201 = vld [vmem:[%s187 + $0x34] sm:$0xf]
    %v202 = vld [vmem:[%s187 + $0x38] sm:$0xf]
    %v203 = vld [vmem:[%s187 + $0x3c] sm:$0xf]
    %v220 = vunpack.c.l.b16 %v188
    %v221 = vunpack.c.l.b16 %v189
    %v222 = vunpack.c.l.b16 %v190
    %v223 = vunpack.c.l.b16 %v191
    %v224 = vunpack.c.l.b16 %v192
    %v225 = vunpack.c.l.b16 %v193
    %v226 = vunpack.c.l.b16 %v194
    %v227 = vunpack.c.l.b16 %v195
    %v228 = vunpack.c.l.b16 %v196
    %v229 = vunpack.c.l.b16 %v197
    %v230 = vunpack.c.l.b16 %v198
    %v231 = vunpack.c.l.b16 %v199
    %v232 = vunpack.c.l.b16 %v200
    %v233 = vunpack.c.l.b16 %v201
    %v234 = vunpack.c.l.b16 %v202
    %v235 = vunpack.c.l.b16 %v203
    %v236 = vpack.c.b16 %v221, %v220
    %v237 = vpack.c.b16 %v223, %v222
    %v238 = vpack.c.b16 %v225, %v224
    %v239 = vpack.c.b16 %v227, %v226
    %v240 = vpack.c.b16 %v229, %v228
    %v241 = vpack.c.b16 %v231, %v230
    %v242 = vpack.c.b16 %v233, %v232
    %v243 = vpack.c.b16 %v235, %v234
    %252 = vmatprep.subr.bf16.mxu0 0
    %253 = vmatpush1.bf16.msra.mxu0 %v236
    %254 = vmatprep.subr.bf16.mxu0 0
    %255 = vmatpush1.bf16.msra.mxu0 %v237
    %256 = vmatprep.subr.bf16.mxu0 0
    %257 = vmatpush1.bf16.msra.mxu0 %v238
    %258 = vmatprep.subr.bf16.mxu0 0
    %259 = vmatpush1.bf16.msra.mxu0 %v239
    %260 = vmatprep.subr.bf16.mxu0 0
    %261 = vmatpush1.bf16.msra.mxu0 %v240
    %262 = vmatprep.subr.bf16.mxu0 0
    %263 = vmatpush1.bf16.msra.mxu0 %v241
    %264 = vmatprep.subr.bf16.mxu0 0
    %265 = vmatpush1.bf16.msra.mxu0 %v242
    %266 = vmatprep.subr.bf16.mxu0 0
    %267 = vmatpush1.bf16.msra.mxu0 %v243
    %268 = vmatprep.subr.bf16.mxu0 0
    %269 = vmatpush1.bf16.msra.mxu0 0
    %270 = vmatprep.subr.bf16.mxu0 0
    %271 = vmatpush1.bf16.msra.mxu0 0
    %272 = vmatprep.subr.bf16.mxu0 0
    %273 = vmatpush1.bf16.msra.mxu0 0
    %274 = vmatprep.subr.bf16.mxu0 0
    %275 = vmatpush1.bf16.msra.mxu0 0
    %276 = vmatprep.subr.bf16.mxu0 0
    %277 = vmatpush1.bf16.msra.mxu0 0
    %278 = vmatprep.subr.bf16.mxu0 0
    %279 = vmatpush1.bf16.msra.mxu0 0
    %280 = vmatprep.subr.bf16.mxu0 0
    %281 = vmatpush1.bf16.msra.mxu0 0
    %282 = vmatprep.subr.bf16.mxu0 0
    %283 = vmatpush1.bf16.msra.mxu0 0
    %284 = vmatprep.mubr.bf16.mxu0 0
    %285 = vmatmul.mubr.bf16.gmra.mrb[0].mxu0 %v69
    %v286 = vpop.f32.mrb[0].mxu0
    %v287 = vadd.f32 0.0, %v286
    %v288 = vpop.f32.mrb[0].mxu0
    %v289 = vpop.f32.mrb[0].mxu0
    %v290 = vadd.f32 0.0, %v289
    %v291 = vpop.f32.mrb[0].mxu0
    %292 = vmatprep.mubr.bf16.mxu0 0
    %293 = vmatmul.mubr.bf16.gmra.mrb[0].mxu0 %v70
    %v294 = vpop.f32.mrb[0].mxu0
    %v295 = vadd.f32 0.0, %v294
    %v296 = vpop.f32.mrb[0].mxu0
    %v297 = vpop.f32.mrb[0].mxu0
    %v298 = vadd.f32 0.0, %v297
    %v299 = vpop.f32.mrb[0].mxu0
    %300 = vdwg.mxu0
    %v301 = vlaneseq
    %v302 = vshrl.u32 %v301, 7
    %v303 = vadd.s32 %v302, 8
    %vm304 = vcmp.eq.s32.totalorder %v302, 0
    %vm305 = vcmp.eq.s32.totalorder %v303, 0
    %v306 = vrot.slane %v156, 7
    %v307 = vrot.slane %v159, 7
    %v308 = vrot.slane %v164, 7
    %v309 = vrot.slane %v167, 7
    %vm310 = vcmp.lt.s32.totalorder %v302, 1
    %v311 = vsel %vm310, %v308, %v309
    %v312 = vsel %vm310, %v307, %v308
    %v313 = vsel %vm310, %v306, %v307
    %v314 = vsel %vm310, %v309, %v306
    %v315 = vsel %vm304, 0.0, %v314
    %v316 = vsel %vm305, 0.0, %v313
    %v317 = vsel %vm304, 0.0, %v312
    %v318 = vsel %vm305, 0.0, %v311
    %vm319 = vcmp.eq.s32.totalorder %v302, 15
    %vm320 = vcmp.eq.s32.totalorder %v303, 15
    %v321 = vrot.slane %v287, 1
    %v322 = vrot.slane %v290, 1
    %v323 = vrot.slane %v295, 1
    %v324 = vrot.slane %v298, 1
    %vm325 = vcmp.lt.s32.totalorder %v302, 7
    %v326 = vsel %vm325, %v323, %v324
    %v327 = vsel %vm325, %v322, %v323
    %v328 = vsel %vm325, %v321, %v322
    %v329 = vsel %vm325, %v324, %v321
    %v330 = vsel %vm319, 0.0, %v328
    %v331 = vsel %vm320, 0.0, %v327
    %v332 = vsel %vm319, 0.0, %v326
    %v333 = vsel %vm320, 0.0, %v329
    %v350 = vunpack.c.l.b16 %v171
    %v351 = vunpack.c.l.b16 %v172
    %v352 = vunpack.c.l.b16 %v173
    %v353 = vunpack.c.l.b16 %v174
    %v354 = vunpack.c.l.b16 %v175
    %v355 = vunpack.c.l.b16 %v176
    %v356 = vunpack.c.l.b16 %v177
    %v357 = vunpack.c.l.b16 %v178
    %v358 = vunpack.c.l.b16 %v179
    %v359 = vunpack.c.l.b16 %v180
    %v360 = vunpack.c.l.b16 %v181
    %v361 = vunpack.c.l.b16 %v182
    %v362 = vunpack.c.l.b16 %v183
    %v363 = vunpack.c.l.b16 %v184
    %v364 = vunpack.c.l.b16 %v185
    %v365 = vunpack.c.l.b16 %v186
    %v366 = vpack.c.b16 %v351, %v350
    %v367 = vpack.c.b16 %v353, %v352
    %v368 = vpack.c.b16 %v355, %v354
    %v369 = vpack.c.b16 %v357, %v356
    %v370 = vpack.c.b16 %v359, %v358
    %v371 = vpack.c.b16 %v361, %v360
    %v372 = vpack.c.b16 %v363, %v362
    %v373 = vpack.c.b16 %v365, %v364
    %382 = vmatprep.subr.bf16.mxu0 0
    %383 = vmatpush1.bf16.msra.mxu0 %v366
    %384 = vmatprep.subr.bf16.mxu0 0
    %385 = vmatpush1.bf16.msra.mxu0 %v367
    %386 = vmatprep.subr.bf16.mxu0 0
    %387 = vmatpush1.bf16.msra.mxu0 %v368
    %388 = vmatprep.subr.bf16.mxu0 0
    %389 = vmatpush1.bf16.msra.mxu0 %v369
    %390 = vmatprep.subr.bf16.mxu0 0
    %391 = vmatpush1.bf16.msra.mxu0 %v370
    %392 = vmatprep.subr.bf16.mxu0 0
    %393 = vmatpush1.bf16.msra.mxu0 %v371
    %394 = vmatprep.subr.bf16.mxu0 0
    %395 = vmatpush1.bf16.msra.mxu0 %v372
    %396 = vmatprep.subr.bf16.mxu0 0
    %397 = vmatpush1.bf16.msra.mxu0 %v373
    %398 = vmatprep.subr.bf16.mxu0 0
    %399 = vmatpush1.bf16.msra.mxu0 0
    %400 = vmatprep.subr.bf16.mxu0 0
    %401 = vmatpush1.bf16.msra.mxu0 0
    %402 = vmatprep.subr.bf16.mxu0 0
    %403 = vmatpush1.bf16.msra.mxu0 0
    %404 = vmatprep.subr.bf16.mxu0 0
    %405 = vmatpush1.bf16.msra.mxu0 0
    %406 = vmatprep.subr.bf16.mxu0 0
    %407 = vmatpush1.bf16.msra.mxu0 0
    %408 = vmatprep.subr.bf16.mxu0 0
    %409 = vmatpush1.bf16.msra.mxu0 0
    %410 = vmatprep.subr.bf16.mxu0 0
    %411 = vmatpush1.bf16.msra.mxu0 0
    %412 = vmatprep.subr.bf16.mxu0 0
    %413 = vmatpush1.bf16.msra.mxu0 0
    %414 = vmatprep.mubr.bf16.mxu0 0
    %415 = vmatmul.mubr.bf16.gmra.mrb[0].mxu0 %v69
    %v416 = vpop.f32.mrb[0].mxu0
    %v417 = vadd.f32 %v315, %v416
    %v418 = vpop.f32.mrb[0].mxu0
    %v419 = vpop.f32.mrb[0].mxu0
    %v420 = vadd.f32 %v316, %v419
    %v421 = vpop.f32.mrb[0].mxu0
    %422 = vmatprep.mubr.bf16.mxu0 0
    %423 = vmatmul.mubr.bf16.gmra.mrb[0].mxu0 %v70
    %v424 = vpop.f32.mrb[0].mxu0
    %v425 = vadd.f32 %v317, %v424
    %v426 = vpop.f32.mrb[0].mxu0
    %v427 = vpop.f32.mrb[0].mxu0
    %v428 = vadd.f32 %v318, %v427
    %v429 = vpop.f32.mrb[0].mxu0
    %430 = vdwg.mxu0
    %v431 = vadd.f32 %v417, %v330
    %v432 = vadd.f32 %v420, %v331
    %v433 = vadd.f32 %v425, %v332
    %v434 = vadd.f32 %v428, %v333
    %v435 = vmax.f32 %v431, 0.0
    %v436 = vmax.f32 %v432, 0.0
    %v437 = vmax.f32 %v433, 0.0
    %v438 = vmax.f32 %v434, 0.0
    %439 = vst [vmem:[#allocation7] sm:$0xff] %v435
    %440 = vst [vmem:[#allocation7 + $0x8] sm:$0xff] %v436
    %441 = vst [vmem:[#allocation7 + $0x10] sm:$0xff] %v437
    %442 = vst [vmem:[#allocation7 + $0x18] sm:$0xff] %v438
    // Predicated region
    $region18: #{tpu_custom_call.1} parent=1 // pred_check
      _
    $region19: #{tpu_custom_call.1} parent=1 // pred_check_branch
      %444 = sbr.rel (0) target = $region21
    $region20: #{tpu_custom_call.1} parent=1 // pred_region
      %s446 = ssub.s32 512, 512
      %447 = vsyncadd [#allocation4], %s446
      %s448 = sshll.u32 [#allocation7], 4
      %s449 = int_to_ptr.vmem [resolvable:$true] %s448
      %454 = dma.vmem_to_hbm [thread:$0]  %s449, 512, %s2, [#allocation4], 128, 128, 8
    $region21: #{tpu_custom_call.1} parent=1 // pred_fallthru
      _
    // Predicated region
    $region22: #{tpu_custom_call.1} parent=1 // pred_check
      _
    $region23: #{tpu_custom_call.1} parent=1 // pred_check_branch
      %456 = sbr.rel (0) target = $region25
    $region24: #{tpu_custom_call.1} parent=1 // pred_region
      %457 = dma.done [#allocation4], 512
    $region25: #{tpu_custom_call.1} parent=1 // pred_fallthru
      _
    %458 = vsyncpa [#allocation3], 1
    %459 = vsyncpa [#allocation6], 1
    %460 = vsyncpa [#allocation4], 1

</llo_original>
